<compile_context>
chip_gen: v7x
topology: tpu7x:2x2x1
jax: 0.10.0
libtpu: 0.0.40
codegen_flags: <defaults>
</compile_context>

<pallas_src>
import functools
from typing import NamedTuple

import jax
import jax.numpy as jnp
from jax.experimental import pallas as pl
from jax.experimental.pallas import tpu as pltpu

LANE = 128
SUBLANE = 8


def _round_up(x, m):
    return (x + m - 1) // m * m


def _cdiv(a, b):
    return (a + b - 1) // b


class CLinearPlan(NamedTuple):
    in_f: int
    out_f: int
    Kp: int            # padded K (multiple of tk)
    Np: int            # padded N (multiple of tn)
    tk: int
    tn: int
    tm_max: int
    compute_dtype: object


def plan_clinear(in_f, out_f, *, compute_dtype=jnp.bfloat16,
                 tm_max=512, tn_max=512, tk_max=2048,
                 resident_weight_bytes=8 << 20):
    """Choose tile sizes once, at module-init time (static shapes only)."""
    Kp = _round_up(in_f, LANE)
    Np = _round_up(out_f, LANE)
    itemsize = jnp.dtype(compute_dtype).itemsize
    if (Kp <= tk_max and Np <= tn_max
            and Kp * Np * itemsize <= resident_weight_bytes):
        # Weight fully VMEM-resident: constant W block index over the grid.
        tk, tn = Kp, Np
    else:
        # Pick the 128-multiples that minimize zero padding.
        ksteps = _cdiv(Kp, tk_max)
        tk = _round_up(_cdiv(Kp, ksteps), LANE)
        Kp = tk * ksteps
        nsteps = _cdiv(Np, tn_max)
        tn = _round_up(_cdiv(Np, nsteps), LANE)
        Np = tn * nsteps
    return CLinearPlan(in_f, out_f, Kp, Np, tk, tn, tm_max,
                       jnp.dtype(compute_dtype))


def prepare_clinear_params(weight, bias, plan):
    """One-time weight transpose + pad + cast; keep off the per-call hot path.

    weight: [out_f, in_f] (PyTorch convention), bias: [out_f].
    Returns W.T padded to [Kp, Np] (compute dtype) and bias as [1, Np] f32.
    """
    out_f, in_f = weight.shape
    assert (in_f, out_f) == (plan.in_f, plan.out_f)
    w_t = jnp.pad(weight.T, ((0, plan.Kp - in_f), (0, plan.Np - out_f)))
    w_t = w_t.astype(plan.compute_dtype)
    b = jnp.pad(bias.astype(jnp.float32), (0, plan.Np - out_f))
    return w_t, b.reshape(1, plan.Np)


def _clinear_kernel_noacc(x_ref, w_ref, b_ref, o_ref, *, scale):
    """Single-K-step fast path: no scratch, no pl.when.

    x_ref: (tm, Kp)  w_ref: (Kp, tn)  b_ref: (1, tn) f32  o_ref: (tm, tn).
    """
    acc = jnp.dot(x_ref[...], w_ref[...], preferred_element_type=jnp.float32)
    o_ref[...] = ((acc + b_ref[...]) * scale).astype(o_ref.dtype)


def _clinear_kernel_acc(x_ref, w_ref, b_ref, o_ref, acc_ref, *, scale):
    """K-tiled path with f32 VMEM accumulator (K is the last, arbitrary axis)."""
    k = pl.program_id(2)

    @pl.when(k == 0)
    def _():
        acc_ref[...] = jnp.zeros_like(acc_ref)

    acc_ref[...] += jnp.dot(x_ref[...], w_ref[...],
                            preferred_element_type=jnp.float32)

    @pl.when(k == pl.num_programs(2) - 1)
    def _():
        # y = scale * (x @ W.T + bias): fold scale once per output tile, in f32.
        o_ref[...] = ((acc_ref[...] + b_ref[...]) * scale).astype(o_ref.dtype)


def clinear_forward(x, w_t, b, scale, plan):
    """x: [B, in_f]; w_t: [Kp, Np] (pre-transposed/padded); b: [1, Np] f32."""
    if not isinstance(scale, (int, float)):
        raise TypeError(
            "scale must be a static Python scalar (it is baked into the "
            f"kernel); got {type(scale)}")
    scale = float(scale)

    B, in_f = x.shape
    assert in_f == plan.in_f
    assert w_t.shape == (plan.Kp, plan.Np) and b.shape == (1, plan.Np)
    Kp, Np, tk, tn = plan.Kp, plan.Np, plan.tk, plan.tn
    out_dtype = x.dtype

    tm = min(plan.tm_max, _round_up(B, SUBLANE))
    Mp = _round_up(B, tm)

    # Only touch x (cast / pad) when actually needed; no-op otherwise.
    x_c = x.astype(plan.compute_dtype)
    if (Mp, Kp) != (B, in_f):
        x_c = jnp.pad(x_c, ((0, Mp - B), (0, Kp - in_f)))

    msteps, nsteps, ksteps = Mp // tm, Np // tn, Kp // tk

    itemsize_c = jnp.dtype(plan.compute_dtype).itemsize
    itemsize_o = jnp.dtype(out_dtype).itemsize
    needed = (2 * (tm * tk + tk * tn) * itemsize_c   # double-buffered x/W tiles
              + 2 * tn * 4                           # bias tile
              + 2 * tm * tn * itemsize_o)            # output tiles
    if ksteps > 1:
        needed += tm * tn * 4                        # f32 accumulator scratch
    # Explicit scoped-VMEM limit: above v5e's 16 MiB default, with headroom,
    # capped so aggressive configs stay inside v7x's 64 MiB physical VMEM.
    vmem_limit = int(min(64 << 20, max(32 << 20, needed + (8 << 20))))

    cost = pl.CostEstimate(
        flops=2 * Mp * Np * Kp,
        transcendentals=0,
        bytes_accessed=(Mp * Kp * itemsize_c
                        + msteps * Kp * Np * itemsize_c
                        + Np * 4
                        + Mp * Np * itemsize_o))

    if ksteps == 1:
        grid = (msteps, nsteps)
        grid_spec = pltpu.PrefetchScalarGridSpec(
            num_scalar_prefetch=0,
            grid=grid,
            in_specs=[
                pl.BlockSpec((tm, tk), lambda i, j: (i, 0)),  # x  [M, K]
                pl.BlockSpec((tk, tn), lambda i, j: (0, j)),  # W.T[K, N]
                pl.BlockSpec((1, tn), lambda i, j: (0, j)),   # b  [1, N]
            ],
            out_specs=pl.BlockSpec((tm, tn), lambda i, j: (i, j)),
        )
        kernel = functools.partial(_clinear_kernel_noacc, scale=scale)
        semantics = ("parallel", "parallel")
    else:
        grid = (msteps, nsteps, ksteps)
        grid_spec = pltpu.PrefetchScalarGridSpec(
            num_scalar_prefetch=0,
            grid=grid,
            in_specs=[
                pl.BlockSpec((tm, tk), lambda i, j, k: (i, k)),  # x  [M, K]
                pl.BlockSpec((tk, tn), lambda i, j, k: (k, j)),  # W.T[K, N]
                pl.BlockSpec((1, tn), lambda i, j, k: (0, j)),   # b  [1, N]
            ],
            out_specs=pl.BlockSpec((tm, tn), lambda i, j, k: (i, j)),
            scratch_shapes=[pltpu.VMEM((tm, tn), jnp.float32)],
        )
        kernel = functools.partial(_clinear_kernel_acc, scale=scale)
        semantics = ("parallel", "parallel", "arbitrary")

    out_p = pl.pallas_call(
        kernel,
        out_shape=jax.ShapeDtypeStruct((Mp, Np), out_dtype),
        grid_spec=grid_spec,
        compiler_params=pltpu.CompilerParams(
            dimension_semantics=semantics,
            vmem_limit_bytes=vmem_limit),
        cost_estimate=cost,
    )(x_c, w_t, b)

    if (Mp, Np) != (B, plan.out_f):
        out_p = out_p[:B, :plan.out_f]
    return out_p


if __name__ == "__main__":
    # Small shapes consistent with the module: CLinear(in=32, out=16), batch=8.
    B, IN_F, OUT_F = 8, 32, 16
    scale = (2.0 / IN_F) ** 0.5

    key = jax.random.PRNGKey(0)
    kx, kw = jax.random.split(key)
    x = jax.random.normal(kx, (B, IN_F), dtype=jnp.float32)
    # Deterministic init matching nn.init.normal_(weight), zeros_(bias).
    weight = jax.random.normal(kw, (OUT_F, IN_F), dtype=jnp.float32)
    bias = jnp.zeros((OUT_F,), dtype=jnp.float32)

    y_ref = (x * scale) @ weight.T + bias * scale

    # 1) f32 compute path (weight-resident, single-K fast path): strict check.
    plan32 = plan_clinear(IN_F, OUT_F, compute_dtype=jnp.float32)
    w32, b32 = prepare_clinear_params(weight, bias, plan32)
    y32 = jax.block_until_ready(clinear_forward(x, w32, b32, scale, plan32))
    assert y32.shape == (B, OUT_F)
    assert jnp.allclose(y32, y_ref, atol=1e-4, rtol=1e-4)

    # 2) bf16 compute path (MXU-native x/W, f32 accumulator + epilogue).
    plan16 = plan_clinear(IN_F, OUT_F, compute_dtype=jnp.bfloat16)
    w16, b16 = prepare_clinear_params(weight, bias, plan16)
    y16 = jax.block_until_ready(clinear_forward(x, w16, b16, scale, plan16))
    assert y16.shape == (B, OUT_F)
    assert jnp.allclose(y16, y_ref, atol=5e-2, rtol=2e-2)

    # 3) K-tiled accumulator path (forced small tk) to exercise the 3-D grid.
    B2, IN2, OUT2 = 16, 512, 256
    scale2 = (2.0 / IN2) ** 0.5
    kx2, kw2 = jax.random.split(jax.random.PRNGKey(1))
    x2 = jax.random.normal(kx2, (B2, IN2), dtype=jnp.float32)
    weight2 = jax.random.normal(kw2, (OUT2, IN2), dtype=jnp.float32)
    bias2 = jnp.zeros((OUT2,), dtype=jnp.float32)
    plan_mk = plan_clinear(IN2, OUT2, compute_dtype=jnp.float32, tk_max=256)
    assert plan_mk.Kp // plan_mk.tk > 1  # really multi-K
    w2p, b2p = prepare_clinear_params(weight2, bias2, plan_mk)
    y2 = jax.block_until_ready(clinear_forward(x2, w2p, b2p, scale2, plan_mk))
    y2_ref = (x2 * scale2) @ weight2.T + bias2 * scale2
    assert y2.shape == (B2, OUT2)
    assert jnp.allclose(y2, y2_ref, atol=1e-3, rtol=1e-3)

    print("KERNEL_OK")
</pallas_src>

<mosaic_0001>
module attributes {stable_mosaic.version = 11 : i64} {
  func.func @_clinear_kernel_noacc(%arg0: i32, %arg1: i32, %arg2: memref<8x128xf32, #tpu.memory_space<vmem>>, %arg3: memref<128x128xf32, #tpu.memory_space<vmem>>, %arg4: memref<1x128xf32, #tpu.memory_space<vmem>>, %arg5: memref<8x128xf32, #tpu.memory_space<vmem>>) attributes {dimension_semantics = [#tpu.dimension_semantics<parallel>, #tpu.dimension_semantics<parallel>], iteration_bounds = array<i64: 1, 1>, scalar_prefetch = 0 : i64, scratch_operands = 0 : i64, tpu.core_type = #tpu.core_type<tc>, window_params = [{transform_indices = @transform_0, window_bounds = array<i64: 8, 128>}, {transform_indices = @transform_1, window_bounds = array<i64: 128, 128>}, {transform_indices = @transform_2, window_bounds = array<i64: 1, 128>}, {transform_indices = @transform_3, window_bounds = array<i64: 8, 128>}]} {
    %c0 = arith.constant 0 : index
    %c0_0 = arith.constant 0 : index
    %0 = vector.load %arg2[%c0, %c0_0] : memref<8x128xf32, #tpu.memory_space<vmem>>, vector<8x128xf32>
    %c0_1 = arith.constant 0 : index
    %c0_2 = arith.constant 0 : index
    %1 = vector.load %arg3[%c0_1, %c0_2] : memref<128x128xf32, #tpu.memory_space<vmem>>, vector<128x128xf32>
    %cst = arith.constant dense<0.000000e+00> : vector<8x128xf32>
    %2 = tpu.matmul %0, %1, %cst {dimension_numbers = #tpu.dot_dimension_numbers<[1], [0], [0], [1], [0, 0, 1, 1], [], []>} : vector<8x128xf32>, vector<128x128xf32>, vector<8x128xf32> -> vector<8x128xf32>
    %c0_3 = arith.constant 0 : index
    %c0_4 = arith.constant 0 : index
    %3 = vector.load %arg4[%c0_3, %c0_4] : memref<1x128xf32, #tpu.memory_space<vmem>>, vector<1x128xf32>
    %4 = vector.broadcast %3 : vector<1x128xf32> to vector<8x128xf32>
    %5 = arith.addf %2, %4 : vector<8x128xf32>
    %cst_5 = arith.constant 2.500000e-01 : f32
    %6 = vector.broadcast %cst_5 : f32 to vector<8x128xf32>
    %7 = arith.mulf %5, %6 : vector<8x128xf32>
    %c0_6 = arith.constant 0 : index
    %c0_7 = arith.constant 0 : index
    %8 = vector.load %arg5[%c0_6, %c0_7] : memref<8x128xf32, #tpu.memory_space<vmem>>, vector<8x128xf32>
    tpu.vector_store %arg5[%c0_6, %c0_7], %7 {strides = array<i32>} : memref<8x128xf32, #tpu.memory_space<vmem>>, vector<8x128xf32>,
    return
  }
  func.func @transform_0(%arg0: i32, %arg1: i32) -> (i32, i32) {
    %c0_i32 = arith.constant 0 : i32
    %c0_i32_0 = arith.constant 0 : i32
    return %arg0, %c0_i32 : i32, i32
  }
  func.func @transform_1(%arg0: i32, %arg1: i32) -> (i32, i32) {
    %c0_i32 = arith.constant 0 : i32
    %c0_i32_0 = arith.constant 0 : i32
    return %c0_i32, %arg1 : i32, i32
  }
  func.func @transform_2(%arg0: i32, %arg1: i32) -> (i32, i32) {
    %c0_i32 = arith.constant 0 : i32
    %c0_i32_0 = arith.constant 0 : i32
    return %c0_i32, %arg1 : i32, i32
  }
  func.func @transform_3(%arg0: i32, %arg1: i32) -> (i32, i32) {
    %c0_i32 = arith.constant 0 : i32
    return %arg0, %arg1 : i32, i32
  }
}

</mosaic_0001>

<llo_original>
// kernel: tpu_custom_call.1
$region0: #{tpu_custom_call.1}
  #allocation0 [shape = 'u32[]', space=smem, size = 0x4, offset = 0x4, fixed_abs, tag = 'smem constant byte address 0x4 - core index']
  #allocation1 [shape = 'u32[144,128]{1,0:T(1,128)}', space=vmem, size = 0x12000, scoped, tag = 'internal scratch']
  %s0 = inlined_call_operand.hbm [shape: f32[8,128], index: 0, kind: input, shape index: {}]
  %s1 = inlined_call_operand.hbm [shape: f32[128,128], index: 1, kind: input, shape index: {}]
  %s2 = inlined_call_operand.vmem [shape: f32[1,128], index: 2, kind: input, shape index: {}]
  %s3 = inlined_call_operand.hbm [shape: f32[8,128], index: 3, kind: output, shape index: {}]
  %s4 = sld [smem:[#allocation0]]
  $region30: #{tpu_custom_call.1} parent=0
    _
  %s6 = ssub.s32 1, %s4
  %s7 = scalar_select 0, %s6, %s4
  $region1: #{tpu_custom_call.1} parent=0
    #allocation2 [shape = 'u8[4096]{0}', space=vmem, size = 0x1000, scoped, tag = 'input window, operand 0, single buffered']
    #allocation3 [shape = 's32[1]{0}', space=sflag, size = 0x4, scoped, tag = 'scoped memory for tpu_custom_call.1']
    #allocation4 [shape = 's32[1]{0}', space=sflag, size = 0x4, scoped, tag = 'scoped memory for tpu_custom_call.1']
    #allocation5 [shape = 'u8[65536]{0}', space=vmem, size = 0x10000, scoped, tag = 'input window, operand 1, single buffered']
    #allocation6 [shape = 's32[1]{0}', space=sflag, size = 0x4, scoped, tag = 'scoped memory for tpu_custom_call.1']
    #allocation7 [shape = 'u8[4096]{0}', space=vmem, size = 0x1000, scoped, tag = 'output window, operand 0, single buffered']
    %8 = vsyncpa [#allocation3], 0
    %9 = vsyncpa [#allocation6], 0
    %10 = vsyncpa [#allocation4], 0
    // Predicated region
    $region2: #{tpu_custom_call.1} parent=1 // pred_check
      _
    $region3: #{tpu_custom_call.1} parent=1 // pred_check_branch
      %12 = sbr.rel (0) target = $region5
    $region4: #{tpu_custom_call.1} parent=1 // pred_region
      %s14 = ssub.s32 128, 128
      %15 = vsyncadd [#allocation3], %s14
      %s17 = sshll.u32 [#allocation2], 4
      %s18 = int_to_ptr.vmem [resolvable:$true] %s17
      %20 = dma.hbm_to_vmem [thread:$0]  %s0, 128, %s18, [#allocation3]
    $region5: #{tpu_custom_call.1} parent=1 // pred_fallthru
      _
    // Predicated region
    $region6: #{tpu_custom_call.1} parent=1 // pred_check
      _
    $region7: #{tpu_custom_call.1} parent=1 // pred_check_branch
      %22 = sbr.rel (0) target = $region9
    $region8: #{tpu_custom_call.1} parent=1 // pred_region
      %s24 = ssub.s32 2048, 2048
      %25 = vsyncadd [#allocation6], %s24
      %s26 = sshll.u32 [#allocation5], 4
      %s27 = int_to_ptr.vmem [resolvable:$true] %s26
      %32 = dma.hbm_to_vmem [thread:$0]  %s1, 2048, %s27, [#allocation6], 128, 128, 8
    $region9: #{tpu_custom_call.1} parent=1 // pred_fallthru
      _
    // Predicated region
    $region10: #{tpu_custom_call.1} parent=1 // pred_check
      _
    $region11: #{tpu_custom_call.1} parent=1 // pred_check_branch
      %34 = sbr.rel (0) target = $region13
    $region12: #{tpu_custom_call.1} parent=1 // pred_region
      _
    $region13: #{tpu_custom_call.1} parent=1 // pred_fallthru
      _
    // Predicated region
    $region14: #{tpu_custom_call.1} parent=1 // pred_check
      _
    $region15: #{tpu_custom_call.1} parent=1 // pred_check_branch
      %36 = sbr.rel (0) target = $region17
    $region16: #{tpu_custom_call.1} parent=1 // pred_region
      %37 = dma.done [#allocation3], 128
    $region17: #{tpu_custom_call.1} parent=1 // pred_fallthru
      _
    // Predicated region
    $region18: #{tpu_custom_call.1} parent=1 // pred_check
      _
    $region19: #{tpu_custom_call.1} parent=1 // pred_check_branch
      %39 = sbr.rel (0) target = $region21
    $region20: #{tpu_custom_call.1} parent=1 // pred_region
      %40 = dma.done [#allocation6], 2048
    $region21: #{tpu_custom_call.1} parent=1 // pred_fallthru
      _
    %v41 = vld [vmem:[#allocation2] sm:$0xff]
    %v42 = vld [vmem:[#allocation5] sm:$0xff]
    %v43 = vld [vmem:[#allocation5 + $0x8] sm:$0xff]
    %v44 = vld [vmem:[#allocation5 + $0x10] sm:$0xff]
    %v45 = vld [vmem:[#allocation5 + $0x18] sm:$0xff]
    %v46 = vld [vmem:[#allocation5 + $0x20] sm:$0xff]
    %v47 = vld [vmem:[#allocation5 + $0x28] sm:$0xff]
    %v48 = vld [vmem:[#allocation5 + $0x30] sm:$0xff]
    %v49 = vld [vmem:[#allocation5 + $0x38] sm:$0xff]
    %v50 = vld [vmem:[#allocation5 + $0x40] sm:$0xff]
    %v51 = vld [vmem:[#allocation5 + $0x48] sm:$0xff]
    %v52 = vld [vmem:[#allocation5 + $0x50] sm:$0xff]
    %v53 = vld [vmem:[#allocation5 + $0x58] sm:$0xff]
    %v54 = vld [vmem:[#allocation5 + $0x60] sm:$0xff]
    %v55 = vld [vmem:[#allocation5 + $0x68] sm:$0xff]
    %v56 = vld [vmem:[#allocation5 + $0x70] sm:$0xff]
    %v57 = vld [vmem:[#allocation5 + $0x78] sm:$0xff]
    %v58 = vld [vmem:[%s2] sm:$0x1]
    %v60 = vlaneseq
    %v61 = vshrl.u32 %v60, 7
    %v62 = vsub.s32 0, %v61
    %v63 = vrot.slane %v58, %v62
    %65 = vmatprep.subr.mxu0 0.0
    %66 = vmatpush1.msra.mxu0 %v42
    %67 = vmatprep.subr.mxu0 0.0
    %68 = vmatpush1.msra.mxu0 %v43
    %69 = vmatprep.subr.mxu0 0.0
    %70 = vmatpush1.msra.mxu0 %v44
    %71 = vmatprep.subr.mxu0 0.0
    %72 = vmatpush1.msra.mxu0 %v45
    %73 = vmatprep.subr.mxu0 0.0
    %74 = vmatpush1.msra.mxu0 %v46
    %75 = vmatprep.subr.mxu0 0.0
    %76 = vmatpush1.msra.mxu0 %v47
    %77 = vmatprep.subr.mxu0 0.0
    %78 = vmatpush1.msra.mxu0 %v48
    %79 = vmatprep.subr.mxu0 0.0
    %80 = vmatpush1.msra.mxu0 %v49
    %81 = vmatprep.subr.mxu0 0.0
    %82 = vmatpush1.msra.mxu0 %v50
    %83 = vmatprep.subr.mxu0 0.0
    %84 = vmatpush1.msra.mxu0 %v51
    %85 = vmatprep.subr.mxu0 0.0
    %86 = vmatpush1.msra.mxu0 %v52
    %87 = vmatprep.subr.mxu0 0.0
    %88 = vmatpush1.msra.mxu0 %v53
    %89 = vmatprep.subr.mxu0 0.0
    %90 = vmatpush1.msra.mxu0 %v54
    %91 = vmatprep.subr.mxu0 0.0
    %92 = vmatpush1.msra.mxu0 %v55
    %93 = vmatprep.subr.mxu0 0.0
    %94 = vmatpush1.msra.mxu0 %v56
    %95 = vmatprep.subr.mxu0 0.0
    %96 = vmatpush1.msra.mxu0 %v57
    %97 = vmatprep.subr.mxu0 0.0
    %98 = vmatpush1.msra.mxu0 0.0
    %99 = vmatprep.subr.mxu0 0.0
    %100 = vmatpush1.msra.mxu0 0.0
    %101 = vmatprep.subr.mxu0 0.0
    %102 = vmatpush1.msra.mxu0 0.0
    %103 = vmatprep.subr.mxu0 0.0
    %104 = vmatpush1.msra.mxu0 0.0
    %105 = vmatprep.subr.mxu0 0.0
    %106 = vmatpush1.msra.mxu0 0.0
    %107 = vmatprep.subr.mxu0 0.0
    %108 = vmatpush1.msra.mxu0 0.0
    %109 = vmatprep.subr.mxu0 0.0
    %110 = vmatpush1.msra.mxu0 0.0
    %111 = vmatprep.subr.mxu0 0.0
    %112 = vmatpush1.msra.mxu0 0.0
    %113 = vmatprep.subr.mxu0 0.0
    %114 = vmatpush1.msra.mxu0 0.0
    %115 = vmatprep.subr.mxu0 0.0
    %116 = vmatpush1.msra.mxu0 0.0
    %117 = vmatprep.subr.mxu0 0.0
    %118 = vmatpush1.msra.mxu0 0.0
    %119 = vmatprep.subr.mxu0 0.0
    %120 = vmatpush1.msra.mxu0 0.0
    %121 = vmatprep.subr.mxu0 0.0
    %122 = vmatpush1.msra.mxu0 0.0
    %123 = vmatprep.subr.mxu0 0.0
    %124 = vmatpush1.msra.mxu0 0.0
    %125 = vmatprep.subr.mxu0 0.0
    %126 = vmatpush1.msra.mxu0 0.0
    %127 = vmatprep.subr.mxu0 0.0
    %128 = vmatpush1.msra.mxu0 0.0
    %129 = vmatprep.mubr.f32.mxu0 0.0
    %130 = vmatmul.mubr.f32.gmra.mrb[0].mxu0 %v41
    %v131 = vpop.f32.mrb[0].mxu0
    %v132 = vadd.f32 %v63, %v131
    %v133 = vpop.f32.mrb[0].mxu0
    %134 = vdwg.mxu0
    %v135 = vmul.f32 %v132, 0.25
    %136 = vst [vmem:[#allocation7] sm:$0xff] %v135
    // Predicated region
    $region22: #{tpu_custom_call.1} parent=1 // pred_check
      _
    $region23: #{tpu_custom_call.1} parent=1 // pred_check_branch
      %138 = sbr.rel (0) target = $region25
    $region24: #{tpu_custom_call.1} parent=1 // pred_region
      %s140 = ssub.s32 128, 128
      %141 = vsyncadd [#allocation4], %s140
      %s143 = sshll.u32 [#allocation7], 4
      %s144 = int_to_ptr.vmem [resolvable:$true] %s143
      %146 = dma.vmem_to_hbm [thread:$0]  %s144, 128, %s3, [#allocation4]
    $region25: #{tpu_custom_call.1} parent=1 // pred_fallthru
      _
    // Predicated region
    $region26: #{tpu_custom_call.1} parent=1 // pred_check
      _
    $region27: #{tpu_custom_call.1} parent=1 // pred_check_branch
      %148 = sbr.rel (0) target = $region29
    $region28: #{tpu_custom_call.1} parent=1 // pred_region
      %149 = dma.done [#allocation4], 128
    $region29: #{tpu_custom_call.1} parent=1 // pred_fallthru
      _
    %150 = vsyncpa [#allocation3], 1
    %151 = vsyncpa [#allocation6], 1
    %152 = vsyncpa [#allocation4], 1

</llo_original>
